<compile_context>
chip_gen: v7x
topology: tpu7x:2x2x1
jax: 0.10.0
libtpu: 0.0.40
codegen_flags: <defaults>
</compile_context>

<pallas_src>
import jax
import jax.numpy as jnp
from jax.experimental import pallas as pl
from jax.experimental.pallas import tpu as pltpu

_LANE = 128
_SUBLANE = 8


def _round_up(x, m):
    return ((x + m - 1) // m) * m


def _linear_kernel(x_ref, w_ref, o_ref):
    # [TM, d_inp] @ [d_inp, d_model_pad] on the MXU with f32 accumulation.
    o_ref[...] = jnp.dot(
        x_ref[...], w_ref[...], preferred_element_type=jnp.float32
    ).astype(o_ref.dtype)


def prepare_weight(weight):
    """Hoist the transpose + lane padding out of the hot path.

    weight: [d_model, d_inp]  (PyTorch nn.Linear layout)
    returns: [d_inp, d_model_pad] with d_model_pad = round_up(d_model, 128);
             padded columns are zero and sliced off after the kernel."""
    d_model, d_inp = weight.shape
    d_model_pad = _round_up(d_model, _LANE)
    w_t = weight.T  # [d_inp, d_model]
    if d_model_pad != d_model:
        w_t = jnp.pad(w_t, ((0, 0), (0, d_model_pad - d_model)))
    return w_t


def _pick_tile_m(m, d_inp, d_model_pad, itemsize, vmem_budget=12 * 1024 * 1024):
    """Largest row tile (multiple of 8, <= 1024) such that the double-buffered
    x / out tiles plus the resident weight fit the VMEM budget."""
    tm = max(_SUBLANE, _round_up(min(m, 1024), _SUBLANE))

    def fits(t):
        return (2 * t * (d_inp + d_model_pad) + d_inp * d_model_pad) * itemsize <= vmem_budget

    while tm > _SUBLANE and not fits(tm):
        tm = max(_SUBLANE, _round_up(tm // 2, _SUBLANE))
    return tm


def time_feature_embedding(x, w_prepared, d_model):
    """x: [B, L, d_inp]; w_prepared: [d_inp, d_model_pad] from prepare_weight.

    Returns [B, L, d_model] = x @ weight.T  (no bias), matching nn.Linear."""
    B, L, d_inp = x.shape
    d_inp_w, d_model_pad = w_prepared.shape
    assert d_inp_w == d_inp, "weight / input feature mismatch"

    M = B * L
    x2d = x.reshape(M, d_inp)

    # Conservative per-element size (f32 accumulation dominates scratch usage).
    itemsize = max(jnp.dtype(x.dtype).itemsize, 4)
    tm = _pick_tile_m(_round_up(M, _SUBLANE), d_inp, d_model_pad, itemsize)
    m_pad = _round_up(M, tm)
    if m_pad != M:
        x2d = jnp.pad(x2d, ((0, m_pad - M), (0, 0)))

    grid = (m_pad // tm,)

    elt = jnp.dtype(x.dtype).itemsize
    cost = pl.CostEstimate(
        flops=2 * m_pad * d_inp * d_model_pad,
        transcendentals=0,
        bytes_accessed=elt * (m_pad * d_inp + d_inp * d_model_pad + m_pad * d_model_pad),
    )

    out2d = pl.pallas_call(
        _linear_kernel,
        out_shape=jax.ShapeDtypeStruct((m_pad, d_model_pad), x.dtype),
        grid_spec=pltpu.PrefetchScalarGridSpec(
            num_scalar_prefetch=0,
            grid=grid,
            in_specs=[
                # x row-tile marches down M; (tm, d_inp): tm is a multiple of 8 and
                # d_inp equals the full array dim -> (8,128) rule satisfied.
                pl.BlockSpec((tm, d_inp), lambda i: (i, 0)),
                # weight resident across all grid steps (fetched once).
                pl.BlockSpec((d_inp, d_model_pad), lambda i: (0, 0)),
            ],
            # lane-dense output (d_model_pad % 128 == 0) -> unmasked stores.
            out_specs=pl.BlockSpec((tm, d_model_pad), lambda i: (i, 0)),
        ),
        compiler_params=pltpu.CompilerParams(
            dimension_semantics=("parallel",),  # independent row blocks, no reduction
        ),
        cost_estimate=cost,
    )(x2d, w_prepared)

    # Strip the M padding and the lane padding on d_model.
    return out2d[:M, :d_model].reshape(B, L, d_model)


if __name__ == "__main__":
    # Module config: freq='h' -> d_inp = 4; small d_model / seq for the demo.
    d_inp = 4
    d_model = 32
    B, L = 2, 8

    key = jax.random.PRNGKey(0)
    k_x, k_w = jax.random.split(key)

    # nn.Linear weight layout: [d_model, d_inp]
    bound = 1.0 / (d_inp ** 0.5)
    weight = jax.random.uniform(
        k_w, (d_model, d_inp), dtype=jnp.float32, minval=-bound, maxval=bound
    )
    x = jax.random.normal(k_x, (B, L, d_inp), dtype=jnp.float32)

    # One-time weight prep (transpose + lane padding), then the kernel call.
    w_prepared = prepare_weight(weight)
    out = time_feature_embedding(x, w_prepared, d_model)
    out = jax.block_until_ready(out)

    # Reference: same semantics as torch nn.Linear(bias=False).
    ref = jnp.einsum("bld,md->blm", x, weight)
    assert out.shape == (B, L, d_model)
    assert jnp.allclose(out, ref, atol=1e-5, rtol=1e-5)

    print("KERNEL_OK")
</pallas_src>

<mosaic_0001>
module attributes {stable_mosaic.version = 11 : i64} {
  func.func @_linear_kernel(%arg0: i32, %arg1: memref<16x4xf32, #tpu.memory_space<vmem>>, %arg2: memref<4x128xf32, #tpu.memory_space<vmem>>, %arg3: memref<16x128xf32, #tpu.memory_space<vmem>>) attributes {dimension_semantics = [#tpu.dimension_semantics<parallel>], iteration_bounds = array<i64: 1>, scalar_prefetch = 0 : i64, scratch_operands = 0 : i64, tpu.core_type = #tpu.core_type<tc>, window_params = [{transform_indices = @transform_0, window_bounds = array<i64: 16, 4>}, {pipeline_mode = #tpu.pipeline_mode<synchronous>, transform_indices = @transform_1, window_bounds = array<i64: 4, 128>}, {transform_indices = @transform_2, window_bounds = array<i64: 16, 128>}]} {
    %c0 = arith.constant 0 : index
    %c0_0 = arith.constant 0 : index
    %0 = vector.load %arg1[%c0, %c0_0] : memref<16x4xf32, #tpu.memory_space<vmem>>, vector<16x4xf32>
    %c0_1 = arith.constant 0 : index
    %c0_2 = arith.constant 0 : index
    %1 = vector.load %arg2[%c0_1, %c0_2] : memref<4x128xf32, #tpu.memory_space<vmem>>, vector<4x128xf32>
    %cst = arith.constant dense<0.000000e+00> : vector<16x128xf32>
    %2 = tpu.matmul %0, %1, %cst {dimension_numbers = #tpu.dot_dimension_numbers<[1], [0], [0], [1], [0, 0, 1, 1], [], []>} : vector<16x4xf32>, vector<4x128xf32>, vector<16x128xf32> -> vector<16x128xf32>
    %c0_3 = arith.constant 0 : index
    %c0_4 = arith.constant 0 : index
    %3 = vector.load %arg3[%c0_3, %c0_4] : memref<16x128xf32, #tpu.memory_space<vmem>>, vector<16x128xf32>
    tpu.vector_store %arg3[%c0_3, %c0_4], %2 {strides = array<i32>} : memref<16x128xf32, #tpu.memory_space<vmem>>, vector<16x128xf32>,
    return
  }
  func.func @transform_0(%arg0: i32) -> (i32, i32) {
    %c0_i32 = arith.constant 0 : i32
    %c0_i32_0 = arith.constant 0 : i32
    return %arg0, %c0_i32 : i32, i32
  }
  func.func @transform_1(%arg0: i32) -> (i32, i32) {
    %c0_i32 = arith.constant 0 : i32
    %c0_i32_0 = arith.constant 0 : i32
    %c0_i32_1 = arith.constant 0 : i32
    return %c0_i32, %c0_i32_0 : i32, i32
  }
  func.func @transform_2(%arg0: i32) -> (i32, i32) {
    %c0_i32 = arith.constant 0 : i32
    %c0_i32_0 = arith.constant 0 : i32
    return %arg0, %c0_i32 : i32, i32
  }
}

</mosaic_0001>

<llo_original>
// kernel: tpu_custom_call.1
$region0: #{tpu_custom_call.1}
  #allocation0 [shape = 'u32[]', space=smem, size = 0x4, offset = 0x4, fixed_abs, tag = 'smem constant byte address 0x4 - core index']
  #allocation1 [shape = 'u32[144,128]{1,0:T(1,128)}', space=vmem, size = 0x12000, scoped, tag = 'internal scratch']
  %s0 = inlined_call_operand.vmem [shape: f32[16,4], index: 0, kind: input, shape index: {}]
  %s1 = inlined_call_operand.vmem [shape: f32[4,128], index: 1, kind: input, shape index: {}]
  %s2 = inlined_call_operand.hbm [shape: f32[16,128], index: 2, kind: output, shape index: {}]
  %s3 = sld [smem:[#allocation0]]
  $region18: #{tpu_custom_call.1} parent=0
    _
  %s5 = ssub.s32 1, %s3
  %s6 = scalar_select 0, %s5, %s3
  $region1: #{tpu_custom_call.1} parent=0
    #allocation2 [shape = 'u8[8192]{0}', space=vmem, size = 0x2000, scoped, tag = 'output window, operand 0, single buffered']
    #allocation3 [shape = 's32[1]{0}', space=sflag, size = 0x4, scoped, tag = 'scoped memory for tpu_custom_call.1']
    %7 = vsyncpa [#allocation3], 0
    // Predicated region
    $region2: #{tpu_custom_call.1} parent=1 // pred_check
      _
    $region3: #{tpu_custom_call.1} parent=1 // pred_check_branch
      %9 = sbr.rel (0) target = $region5
    $region4: #{tpu_custom_call.1} parent=1 // pred_region
      _
    $region5: #{tpu_custom_call.1} parent=1 // pred_fallthru
      _
    // Predicated region
    $region6: #{tpu_custom_call.1} parent=1 // pred_check
      _
    $region7: #{tpu_custom_call.1} parent=1 // pred_check_branch
      %11 = sbr.rel (0) target = $region9
    $region8: #{tpu_custom_call.1} parent=1 // pred_region
      _
    $region9: #{tpu_custom_call.1} parent=1 // pred_fallthru
      _
    %v12 = vld [vmem:[%s0] sm:$0xff]
    %v13 = vld [vmem:[%s0 + $0x8] sm:$0xff]
    %v14 = vld [vmem:[%s1] sm:$0xf]
    %vm15 = vcmask 31744
    %v17 = vsel %vm15, %v12, 0
    %v20 = vsel %vm15, %v13, 0
    %vm22 = vcmask 1043456
    %v24 = vsel %vm22, %v14, 0
    %26 = vmatprep.subr.mxu0 0.0
    %27 = vmatpush1.msra.mxu0 %v24
    %28 = vmatprep.subr.mxu0 0.0
    %29 = vmatpush1.msra.mxu0 0.0
    %30 = vmatprep.subr.mxu0 0.0
    %31 = vmatpush1.msra.mxu0 0.0
    %32 = vmatprep.subr.mxu0 0.0
    %33 = vmatpush1.msra.mxu0 0.0
    %34 = vmatprep.subr.mxu0 0.0
    %35 = vmatpush1.msra.mxu0 0.0
    %36 = vmatprep.subr.mxu0 0.0
    %37 = vmatpush1.msra.mxu0 0.0
    %38 = vmatprep.subr.mxu0 0.0
    %39 = vmatpush1.msra.mxu0 0.0
    %40 = vmatprep.subr.mxu0 0.0
    %41 = vmatpush1.msra.mxu0 0.0
    %42 = vmatprep.subr.mxu0 0.0
    %43 = vmatpush1.msra.mxu0 0.0
    %44 = vmatprep.subr.mxu0 0.0
    %45 = vmatpush1.msra.mxu0 0.0
    %46 = vmatprep.subr.mxu0 0.0
    %47 = vmatpush1.msra.mxu0 0.0
    %48 = vmatprep.subr.mxu0 0.0
    %49 = vmatpush1.msra.mxu0 0.0
    %50 = vmatprep.subr.mxu0 0.0
    %51 = vmatpush1.msra.mxu0 0.0
    %52 = vmatprep.subr.mxu0 0.0
    %53 = vmatpush1.msra.mxu0 0.0
    %54 = vmatprep.subr.mxu0 0.0
    %55 = vmatpush1.msra.mxu0 0.0
    %56 = vmatprep.subr.mxu0 0.0
    %57 = vmatpush1.msra.mxu0 0.0
    %58 = vmatprep.subr.mxu0 0.0
    %59 = vmatpush1.msra.mxu0 0.0
    %60 = vmatprep.subr.mxu0 0.0
    %61 = vmatpush1.msra.mxu0 0.0
    %62 = vmatprep.subr.mxu0 0.0
    %63 = vmatpush1.msra.mxu0 0.0
    %64 = vmatprep.subr.mxu0 0.0
    %65 = vmatpush1.msra.mxu0 0.0
    %66 = vmatprep.subr.mxu0 0.0
    %67 = vmatpush1.msra.mxu0 0.0
    %68 = vmatprep.subr.mxu0 0.0
    %69 = vmatpush1.msra.mxu0 0.0
    %70 = vmatprep.subr.mxu0 0.0
    %71 = vmatpush1.msra.mxu0 0.0
    %72 = vmatprep.subr.mxu0 0.0
    %73 = vmatpush1.msra.mxu0 0.0
    %74 = vmatprep.subr.mxu0 0.0
    %75 = vmatpush1.msra.mxu0 0.0
    %76 = vmatprep.subr.mxu0 0.0
    %77 = vmatpush1.msra.mxu0 0.0
    %78 = vmatprep.subr.mxu0 0.0
    %79 = vmatpush1.msra.mxu0 0.0
    %80 = vmatprep.subr.mxu0 0.0
    %81 = vmatpush1.msra.mxu0 0.0
    %82 = vmatprep.subr.mxu0 0.0
    %83 = vmatpush1.msra.mxu0 0.0
    %84 = vmatprep.subr.mxu0 0.0
    %85 = vmatpush1.msra.mxu0 0.0
    %86 = vmatprep.subr.mxu0 0.0
    %87 = vmatpush1.msra.mxu0 0.0
    %88 = vmatprep.subr.mxu0 0.0
    %89 = vmatpush1.msra.mxu0 0.0
    %90 = vmatprep.mubr.f32.mxu0 0.0
    %91 = vmatmul.mubr.f32.gmra.mrb[0].mxu0 %v17
    %v92 = vpop.f32.mrb[0].mxu0
    %v93 = vadd.f32 0.0, %v92
    %v94 = vpop.f32.mrb[0].mxu0
    %95 = vmatprep.mubr.f32.mxu0 0.0
    %96 = vmatmul.mubr.f32.gmra.mrb[0].mxu0 %v20
    %v97 = vpop.f32.mrb[0].mxu0
    %v98 = vadd.f32 0.0, %v97
    %v99 = vpop.f32.mrb[0].mxu0
    %100 = vdwg.mxu0
    %101 = vst [vmem:[#allocation2] sm:$0xff] %v93
    %102 = vst [vmem:[#allocation2 + $0x8] sm:$0xff] %v98
    // Predicated region
    $region10: #{tpu_custom_call.1} parent=1 // pred_check
      _
    $region11: #{tpu_custom_call.1} parent=1 // pred_check_branch
      %104 = sbr.rel (0) target = $region13
    $region12: #{tpu_custom_call.1} parent=1 // pred_region
      %s106 = ssub.s32 256, 256
      %107 = vsyncadd [#allocation3], %s106
      %s108 = sshll.u32 [#allocation2], 4
      %s109 = int_to_ptr.vmem [resolvable:$true] %s108
      %114 = dma.vmem_to_hbm [thread:$0]  %s109, 256, %s2, [#allocation3], 128, 128, 8
    $region13: #{tpu_custom_call.1} parent=1 // pred_fallthru
      _
    // Predicated region
    $region14: #{tpu_custom_call.1} parent=1 // pred_check
      _
    $region15: #{tpu_custom_call.1} parent=1 // pred_check_branch
      %116 = sbr.rel (0) target = $region17
    $region16: #{tpu_custom_call.1} parent=1 // pred_region
      %117 = dma.done [#allocation3], 256
    $region17: #{tpu_custom_call.1} parent=1 // pred_fallthru
      _
    %118 = vsyncpa [#allocation3], 1

</llo_original>
